<compile_context>
chip_gen: v6e
topology: v6e:2x2x1
jax: 0.10.0
libtpu: 0.0.40
codegen_flags: <defaults>
</compile_context>

<pallas_src>
import jax
import jax.numpy as jnp
from jax import lax
from jax.experimental import pallas as pl
from jax.experimental.pallas import tpu as pltpu


def _linear_kernel(x_ref, w_ref, o_ref):
    # x_ref: [TM, in_features]; w_ref: [out_features, in_features] (PyTorch
    # layout). Contract over the shared last axis -> [TM, out_features]; the
    # contraction-dim flip happens on-chip, no transposed HBM copy needed.
    o_ref[...] = lax.dot_general(
        x_ref[...],
        w_ref[...],
        dimension_numbers=(((1,), (1,)), ((), ())),
        preferred_element_type=jnp.float32,
    ).astype(o_ref.dtype)


def linear_forward(x, w, *, block_m=512):
    """y = x @ w.T  (nn.Linear(in_features, 1, bias=False) forward).

    x: [B, in_features]; w: [out_features, in_features] (PyTorch layout).
    """
    B, D = x.shape
    out_features = w.shape[0]

    # Full batch in one block when small; otherwise tile the batch and let
    # Pallas double-buffer the x / out DMAs while the weight stays resident.
    tm = B if B <= block_m else block_m
    grid = (pl.cdiv(B, tm),)

    return pl.pallas_call(
        _linear_kernel,
        out_shape=jax.ShapeDtypeStruct((B, out_features), x.dtype),
        grid=grid,
        in_specs=[
            pl.BlockSpec((tm, D), lambda i: (i, 0)),            # batch tile of x
            pl.BlockSpec((out_features, D), lambda i: (0, 0)),  # weight, VMEM-resident
        ],
        out_specs=pl.BlockSpec((tm, out_features), lambda i: (i, 0)),
        compiler_params=pltpu.CompilerParams(
            dimension_semantics=("parallel",),
        ),
    )(x, w)


def _reference(x, w):
    return x @ w.T


if __name__ == "__main__":
    # Module config consistent with the forward: arbitrary in_features, out=1.
    in_features = 16
    batch = 2

    key = jax.random.PRNGKey(0)
    k_w, k_x = jax.random.split(key, 2)

    # PyTorch Linear weight layout: [out_features, in_features], no bias.
    w = jax.random.normal(k_w, (1, in_features), jnp.float32) * 0.1
    x = jax.random.normal(k_x, (batch, in_features), jnp.float32)

    out = linear_forward(x, w)
    out = jax.block_until_ready(out)

    ref = _reference(x, w)
    assert out.shape == (batch, 1)
    assert jnp.allclose(out, ref, atol=1e-5, rtol=1e-5), "mismatch vs reference"

    print("KERNEL_OK")
</pallas_src>

<mosaic_0001>
module attributes {stable_mosaic.version = 11 : i64} {
  func.func @_linear_kernel(%arg0: i32, %arg1: memref<2x16xf32, #tpu.memory_space<vmem>>, %arg2: memref<1x16xf32, #tpu.memory_space<vmem>>, %arg3: memref<2x1xf32, #tpu.memory_space<vmem>>) attributes {dimension_semantics = [#tpu.dimension_semantics<parallel>], iteration_bounds = array<i64: 1>, scalar_prefetch = 0 : i64, scratch_operands = 0 : i64, tpu.core_type = #tpu.core_type<tc>, window_params = [{transform_indices = @transform_0, window_bounds = array<i64: 2, 16>}, {pipeline_mode = #tpu.pipeline_mode<synchronous>, transform_indices = @transform_1, window_bounds = array<i64: 1, 16>}, {transform_indices = @transform_2, window_bounds = array<i64: 2, 1>}]} {
    %c0 = arith.constant 0 : index
    %c0_0 = arith.constant 0 : index
    %0 = vector.load %arg1[%c0, %c0_0] : memref<2x16xf32, #tpu.memory_space<vmem>>, vector<2x16xf32>
    %c0_1 = arith.constant 0 : index
    %c0_2 = arith.constant 0 : index
    %1 = vector.load %arg2[%c0_1, %c0_2] : memref<1x16xf32, #tpu.memory_space<vmem>>, vector<1x16xf32>
    %cst = arith.constant dense<0.000000e+00> : vector<2x1xf32>
    %2 = tpu.matmul %0, %1, %cst {dimension_numbers = #tpu.dot_dimension_numbers<[1], [1], [0], [0], [0, 0, 1, 0], [], []>} : vector<2x16xf32>, vector<1x16xf32>, vector<2x1xf32> -> vector<2x1xf32>
    %c0_3 = arith.constant 0 : index
    %c0_4 = arith.constant 0 : index
    %3 = vector.load %arg3[%c0_3, %c0_4] : memref<2x1xf32, #tpu.memory_space<vmem>>, vector<2x1xf32>
    tpu.vector_store %arg3[%c0_3, %c0_4], %2 {strides = array<i32>} : memref<2x1xf32, #tpu.memory_space<vmem>>, vector<2x1xf32>,
    return
  }
  func.func @transform_0(%arg0: i32) -> (i32, i32) {
    %c0_i32 = arith.constant 0 : i32
    %c0_i32_0 = arith.constant 0 : i32
    return %arg0, %c0_i32 : i32, i32
  }
  func.func @transform_1(%arg0: i32) -> (i32, i32) {
    %c0_i32 = arith.constant 0 : i32
    %c0_i32_0 = arith.constant 0 : i32
    %c0_i32_1 = arith.constant 0 : i32
    return %c0_i32, %c0_i32_0 : i32, i32
  }
  func.func @transform_2(%arg0: i32) -> (i32, i32) {
    %c0_i32 = arith.constant 0 : i32
    %c0_i32_0 = arith.constant 0 : i32
    return %arg0, %c0_i32 : i32, i32
  }
}

</mosaic_0001>

<llo_original>
// kernel: tpu_custom_call.1
$region0: #{tpu_custom_call.1}
  #allocation0 [shape = 'u32[]', space=smem, size = 0x4, offset = 0x4, fixed_abs, tag = 'smem constant byte address 0x4 - core index']
  #allocation1 [shape = 'u32[144,128]{1,0:T(1,128)}', space=vmem, size = 0x12000, scoped, tag = 'internal scratch']
  %s0 = inlined_call_operand.hbm [shape: f32[2,16], index: 0, kind: input, shape index: {}]
  %s1 = inlined_call_operand.vmem [shape: f32[1,16], index: 1, kind: input, shape index: {}]
  %s2 = inlined_call_operand.vmem [shape: f32[2,1], index: 2, kind: output, shape index: {}]
  %s3 = sld [smem:[#allocation0]]
  $region22: #{tpu_custom_call.1} parent=0
    _
  %s5 = ssub.s32 1, %s3
  %s6 = scalar_select 0, %s5, %s3
  $region1: #{tpu_custom_call.1} parent=0
    #allocation2 [shape = 'u8[1024]{0}', space=vmem, size = 0x400, scoped, tag = 'input window, operand 0, single buffered']
    #allocation3 [shape = 's32[1]{0}', space=sflag, size = 0x4, scoped, tag = 'scoped memory for tpu_custom_call.1']
    %7 = vsyncpa [#allocation3], 0
    // Predicated region
    $region2: #{tpu_custom_call.1} parent=1 // pred_check
      _
    $region3: #{tpu_custom_call.1} parent=1 // pred_check_branch
      %9 = sbr.rel (0) target = $region5
    $region4: #{tpu_custom_call.1} parent=1 // pred_region
      %s11 = ssub.s32 32, 32
      %12 = vsyncadd [#allocation3], %s11
      %s14 = sshll.u32 [#allocation2], 4
      %s15 = int_to_ptr.vmem [resolvable:$true] %s14
      %17 = dma.hbm_to_vmem [thread:$0]  %s0, 32, %s15, [#allocation3]
    $region5: #{tpu_custom_call.1} parent=1 // pred_fallthru
      _
    // Predicated region
    $region6: #{tpu_custom_call.1} parent=1 // pred_check
      _
    $region7: #{tpu_custom_call.1} parent=1 // pred_check_branch
      %19 = sbr.rel (0) target = $region9
    $region8: #{tpu_custom_call.1} parent=1 // pred_region
      _
    $region9: #{tpu_custom_call.1} parent=1 // pred_fallthru
      _
    // Predicated region
    $region10: #{tpu_custom_call.1} parent=1 // pred_check
      _
    $region11: #{tpu_custom_call.1} parent=1 // pred_check_branch
      %21 = sbr.rel (0) target = $region13
    $region12: #{tpu_custom_call.1} parent=1 // pred_region
      %22 = dma.done [#allocation3], 32
    $region13: #{tpu_custom_call.1} parent=1 // pred_fallthru
      _
    %v23 = vld [vmem:[#allocation2] sm:$0x3]
    %v24 = vld [vmem:[%s1] sm:$0x1]
    %v26 = vlaneseq
    %v27 = vshrl.u32 %v26, 7
    %v28 = vsub.s32 0, %v27
    %v29 = vrot.slane %v24, %v28
    %v31 = vmul.f32 %v23, %v29
    %vm32 = vcmask 123904
    %v33 = vsel %vm32, %v31, 0.0
    %34 = vadd.xlane.f32.xlu0 %v33
    %v35 = vpop.xlane.xlu0 %34
    %vm36 = vcmask 1024
    %37 = vst.msk [vmem:[%s2] sm:$0x3] %vm36, %v35
    // Predicated region
    $region14: #{tpu_custom_call.1} parent=1 // pred_check
      _
    $region15: #{tpu_custom_call.1} parent=1 // pred_check_branch
      %39 = sbr.rel (0) target = $region17
    $region16: #{tpu_custom_call.1} parent=1 // pred_region
      _
    $region17: #{tpu_custom_call.1} parent=1 // pred_fallthru
      _
    // Predicated region
    $region18: #{tpu_custom_call.1} parent=1 // pred_check
      _
    $region19: #{tpu_custom_call.1} parent=1 // pred_check_branch
      %41 = sbr.rel (0) target = $region21
    $region20: #{tpu_custom_call.1} parent=1 // pred_region
      _
    $region21: #{tpu_custom_call.1} parent=1 // pred_fallthru
      _
    %42 = vsyncpa [#allocation3], 1

</llo_original>
